<compile_context>
chip_gen: v7x
topology: tpu7x:2x2x1
jax: 0.10.0
libtpu: 0.0.40
codegen_flags: <defaults>
</compile_context>

<pallas_src>
import functools

import jax
import jax.numpy as jnp
from jax.experimental import pallas as pl
from jax.experimental.pallas import tpu as pltpu


def _round_up(x, m):
    return ((x + m - 1) // m) * m


def _alpha_plain_solver_kernel(epoch_ref, alpha_s_ref, alpha_v_ref, c_ref, x_ref,
                               loss_ref, proj_sc, sq_acc, col_acc, *,
                               batch, vectorize, use_projected_gradient):
    i = pl.program_id(0)
    n_steps = pl.num_programs(0)
    k, m = c_ref.shape

    @pl.when(i == 0)
    def _init():
        # proj = alpha @ C as a K-step scalar * row FMA on the VPU (K is tiny);
        # hoisted out of the batch loop: computed once per pallas_call.
        proj = jnp.zeros((1, m), jnp.float32)
        for kk in range(k):
            row = c_ref[pl.ds(kk, 1), :].astype(jnp.float32)        # (1, M)
            proj = proj + alpha_s_ref[kk] * row
        proj_sc[...] = proj
        sq_acc[...] = jnp.zeros_like(sq_acc)
        col_acc[...] = jnp.zeros_like(col_acc)

    # Stream this X tile (G, 8, M): fold into vreg-shaped (8, M) accumulators
    # with pure elementwise VPU adds (no per-tile cross-lane reduction).
    x = x_ref[...].astype(jnp.float32)                               # (G, 8, M)
    sq_acc[...] += jnp.sum(x * x, axis=0)                            # partial sum of x^2
    col_acc[...] += jnp.sum(x, axis=0)                               # partial column sums

    @pl.when(i == n_steps - 1)
    def _finalize():
        proj = proj_sc[...]                                          # (1, M)
        den = jnp.sum(sq_acc[...])                                   # sum x^2
        cross = jnp.sum(col_acc[...] * proj)                         # sum_m colsum[m]*proj[m]
        pnorm = jnp.sum(proj * proj)                                 # |proj|^2
        # sum_{b,m} (x[b,m] - proj[m])^2 = den - 2*cross + B*|proj|^2
        num = den - 2.0 * cross + jnp.float32(batch) * pnorm
        if vectorize:
            loss = num / den
        else:
            loss = num / (den * den)
        if not use_projected_gradient:
            alpha = alpha_v_ref[...].astype(jnp.float32)             # (1, K)
            ep = jnp.full((1, 1), epoch_ref[0], dtype=jnp.int32).astype(jnp.float32)
            coef = -1.0 / ((ep + 1.0) * (ep + 1.0))                  # (1, 1)
            loss = loss + jnp.sum(coef * jnp.log(alpha + 1e-6))
        loss_ref[0, 0] = loss


def alpha_plain_solver_loss(alpha, C, X, epoch, *, vectorize=True,
                            use_projected_gradient=True, tile_rows=None):
    """JAX wrapper mirroring AlphaPlainSolver.forward(X, C, epoch)."""
    alpha = jnp.asarray(alpha, jnp.float32)
    C = jnp.asarray(C)
    X = jnp.asarray(X)
    b, m = X.shape
    k = C.shape[0]
    assert alpha.shape == (1, k)

    if tile_rows is None:
        # ~4 MiB f32 per X tile => ~8 MiB double-buffered; fits every
        # generation's default scoped-VMEM budget (v5e 16 MiB is the smallest).
        target_bytes = 4 * 1024 * 1024
        tile_rows = max(8, min(1024, (target_bytes // (4 * m)) // 8 * 8))
    tile_rows = min(tile_rows, _round_up(b, 8))
    tile_rows = max(8, _round_up(tile_rows, 8))

    b_pad = _round_up(b, tile_rows)
    if b_pad != b:
        # Zero rows contribute nothing to the accumulated sums.
        X = jnp.pad(X, ((0, b_pad - b), (0, 0)))
    n_tiles = b_pad // tile_rows
    g = tile_rows // 8
    # Pre-split the sublane dim in the wrapper (free, row-major split of the
    # leading dim) so the kernel never reshapes a VMEM tile.
    X3 = X.reshape(b_pad // 8, 8, m)

    epoch_arr = jnp.asarray([epoch], dtype=jnp.int32)
    alpha_smem = alpha.reshape(k)

    kernel = functools.partial(
        _alpha_plain_solver_kernel,
        batch=b, vectorize=vectorize,
        use_projected_gradient=use_projected_gradient)

    out = pl.pallas_call(
        kernel,
        out_shape=jax.ShapeDtypeStruct((1, 1), jnp.float32),
        grid_spec=pltpu.PrefetchScalarGridSpec(
            num_scalar_prefetch=1,                   # epoch -> SMEM before grid runs
            grid=(n_tiles,),
            in_specs=[
                pl.BlockSpec(memory_space=pltpu.SMEM),                # alpha scalars (K,)
                pl.BlockSpec((1, k), lambda i, e: (0, 0)),            # alpha (1,K) for log term
                pl.BlockSpec((k, m), lambda i, e: (0, 0)),            # C resident in VMEM
                pl.BlockSpec((g, 8, m), lambda i, e: (i, 0, 0)),      # streamed X tile
            ],
            out_specs=pl.BlockSpec(memory_space=pltpu.SMEM),          # scalar loss
            scratch_shapes=[
                pltpu.VMEM((1, m), jnp.float32),   # proj = alpha @ C
                pltpu.VMEM((8, m), jnp.float32),   # running sum of x*x (vreg-shaped)
                pltpu.VMEM((8, m), jnp.float32),   # running column sums of x
            ]),
        compiler_params=pltpu.CompilerParams(
            dimension_semantics=("arbitrary",)),     # batch axis is a reduction
    )(epoch_arr, alpha_smem, alpha, C, X3)
    return out[0, 0]


def _reference_loss(alpha, C, X, epoch, *, vectorize=True, use_projected_gradient=True):
    """Pure-JAX reference matching the PyTorch forward exactly."""
    alpha = alpha.astype(jnp.float32)
    C = C.astype(jnp.float32)
    X = X.astype(jnp.float32)
    xf = X.reshape(-1)
    den = xf @ xf
    if vectorize:
        C_rep = jnp.tile(C, (1, X.shape[0]))           # C.repeat(1, B)
        loss = jnp.sum((xf - (alpha @ C_rep)) ** 2) / den
    else:
        loss = jnp.sum(((X - alpha @ C) / den) ** 2)
    if not use_projected_gradient:
        loss = loss + (-1.0 / (epoch + 1) ** 2) * jnp.sum(jnp.log(alpha + 1e-6))
    return loss


if __name__ == "__main__":
    # Small deterministic problem: batch=20 (not a tile multiple -> exercises
    # zero-padding of the last tile), features=128, n_clusters=4.
    n_clusters = 4
    batch = 20
    feat = 128
    epoch = 3

    key = jax.random.PRNGKey(0)
    k_alpha, k_c, k_x = jax.random.split(key, 3)

    # Parameter init mirrors torch: alpha = rand(1, n_clusters) * 0.01
    alpha = jax.random.uniform(k_alpha, (1, n_clusters), dtype=jnp.float32) * 0.01
    C = jax.random.normal(k_c, (n_clusters, feat), dtype=jnp.float32)
    X = jax.random.normal(k_x, (batch, feat), dtype=jnp.float32)

    # Force an 8-row tile so the toy batch runs the full multi-tile
    # init / accumulate / finalize path (3 grid steps, padded last tile).
    loss = alpha_plain_solver_loss(alpha, C, X, epoch, tile_rows=8)
    loss = jax.block_until_ready(loss)
    ref = _reference_loss(alpha, C, X, epoch)
    assert jnp.allclose(loss, ref, rtol=1e-4, atol=1e-5), (loss, ref)

    # Default (single-tile) path: whole padded batch in one grid step.
    loss_def = alpha_plain_solver_loss(alpha, C, X, epoch)
    loss_def = jax.block_until_ready(loss_def)
    assert jnp.allclose(loss_def, ref, rtol=1e-4, atol=1e-5), (loss_def, ref)

    # Non-vectorized path with the epoch log-barrier term.
    loss2 = alpha_plain_solver_loss(alpha, C, X, epoch, vectorize=False,
                                    use_projected_gradient=False, tile_rows=8)
    loss2 = jax.block_until_ready(loss2)
    ref2 = _reference_loss(alpha, C, X, epoch, vectorize=False,
                           use_projected_gradient=False)
    assert jnp.allclose(loss2, ref2, rtol=1e-4, atol=1e-5), (loss2, ref2)

    print("KERNEL_OK")
</pallas_src>

<mosaic_0001>
module attributes {stable_mosaic.version = 11 : i64} {
  func.func @_alpha_plain_solver_kernel(%arg0: i32, %arg1: memref<1xi32, #tpu.memory_space<smem>>, %arg2: memref<4xf32, #tpu.memory_space<smem>>, %arg3: memref<1x4xf32, #tpu.memory_space<vmem>>, %arg4: memref<4x128xf32, #tpu.memory_space<vmem>>, %arg5: memref<1x8x128xf32, #tpu.memory_space<vmem>>, %arg6: memref<1x1xf32, #tpu.memory_space<smem>>, %arg7: memref<1x128xf32, #tpu.memory_space<vmem>>, %arg8: memref<8x128xf32, #tpu.memory_space<vmem>>, %arg9: memref<8x128xf32, #tpu.memory_space<vmem>>) attributes {dimension_semantics = [#tpu.dimension_semantics<arbitrary>], iteration_bounds = array<i64: 3>, scalar_prefetch = 1 : i64, scratch_operands = 3 : i64, tpu.core_type = #tpu.core_type<tc>, window_params = [{transform_indices = @transform_0, window_bounds = array<i64: 4>}, {pipeline_mode = #tpu.pipeline_mode<synchronous>, transform_indices = @transform_1, window_bounds = array<i64: 1, 4>}, {pipeline_mode = #tpu.pipeline_mode<synchronous>, transform_indices = @transform_2, window_bounds = array<i64: 4, 128>}, {transform_indices = @transform_3, window_bounds = array<i64: 1, 8, 128>}, {transform_indices = @transform_4, window_bounds = array<i64: 1, 1>}]} {
    %c0_i32 = arith.constant 0 : i32
    %0 = arith.cmpi eq, %arg0, %c0_i32 : i32
    %1 = arith.extui %0 : i1 to i32
    %c0_i32_0 = arith.constant 0 : i32
    %2 = arith.cmpi ne, %1, %c0_i32_0 : i32
    scf.if %2 {
      %cst_13 = arith.constant 0.000000e+00 : f32
      %16 = vector.broadcast %cst_13 : f32 to vector<1x128xf32>
      %c0_14 = arith.constant 0 : index
      %c0_15 = arith.constant 0 : index
      %17 = vector.load %arg4[%c0_14, %c0_15] : memref<4x128xf32, #tpu.memory_space<vmem>>, vector<1x128xf32>
      %c0_16 = arith.constant 0 : index
      %18 = memref.load %arg2[%c0_16] : memref<4xf32, #tpu.memory_space<smem>>
      %19 = vector.broadcast %18 : f32 to vector<1x128xf32>
      %20 = arith.mulf %19, %17 : vector<1x128xf32>
      %21 = arith.addf %16, %20 : vector<1x128xf32>
      %c1 = arith.constant 1 : index
      %c0_17 = arith.constant 0 : index
      %22 = vector.load %arg4[%c1, %c0_17] : memref<4x128xf32, #tpu.memory_space<vmem>>, vector<1x128xf32>
      %c1_18 = arith.constant 1 : index
      %23 = memref.load %arg2[%c1_18] : memref<4xf32, #tpu.memory_space<smem>>
      %24 = vector.broadcast %23 : f32 to vector<1x128xf32>
      %25 = arith.mulf %24, %22 : vector<1x128xf32>
      %26 = arith.addf %21, %25 : vector<1x128xf32>
      %c2 = arith.constant 2 : index
      %c0_19 = arith.constant 0 : index
      %27 = vector.load %arg4[%c2, %c0_19] : memref<4x128xf32, #tpu.memory_space<vmem>>, vector<1x128xf32>
      %c2_20 = arith.constant 2 : index
      %28 = memref.load %arg2[%c2_20] : memref<4xf32, #tpu.memory_space<smem>>
      %29 = vector.broadcast %28 : f32 to vector<1x128xf32>
      %30 = arith.mulf %29, %27 : vector<1x128xf32>
      %31 = arith.addf %26, %30 : vector<1x128xf32>
      %c3 = arith.constant 3 : index
      %c0_21 = arith.constant 0 : index
      %32 = vector.load %arg4[%c3, %c0_21] : memref<4x128xf32, #tpu.memory_space<vmem>>, vector<1x128xf32>
      %c3_22 = arith.constant 3 : index
      %33 = memref.load %arg2[%c3_22] : memref<4xf32, #tpu.memory_space<smem>>
      %34 = vector.broadcast %33 : f32 to vector<1x128xf32>
      %35 = arith.mulf %34, %32 : vector<1x128xf32>
      %36 = arith.addf %31, %35 : vector<1x128xf32>
      %c0_23 = arith.constant 0 : index
      %c0_24 = arith.constant 0 : index
      %37 = vector.load %arg7[%c0_23, %c0_24] : memref<1x128xf32, #tpu.memory_space<vmem>>, vector<1x128xf32>
      tpu.vector_store %arg7[%c0_23, %c0_24], %36 {strides = array<i32>} : memref<1x128xf32, #tpu.memory_space<vmem>>, vector<1x128xf32>,
      %cst_25 = arith.constant 0.000000e+00 : f32
      %38 = vector.broadcast %cst_25 : f32 to vector<8x128xf32>
      %c0_26 = arith.constant 0 : index
      %c0_27 = arith.constant 0 : index
      %39 = vector.load %arg8[%c0_26, %c0_27] : memref<8x128xf32, #tpu.memory_space<vmem>>, vector<8x128xf32>
      tpu.vector_store %arg8[%c0_26, %c0_27], %38 {strides = array<i32>} : memref<8x128xf32, #tpu.memory_space<vmem>>, vector<8x128xf32>,
      %cst_28 = arith.constant 0.000000e+00 : f32
      %40 = vector.broadcast %cst_28 : f32 to vector<8x128xf32>
      %c0_29 = arith.constant 0 : index
      %c0_30 = arith.constant 0 : index
      %41 = vector.load %arg9[%c0_29, %c0_30] : memref<8x128xf32, #tpu.memory_space<vmem>>, vector<8x128xf32>
      tpu.vector_store %arg9[%c0_29, %c0_30], %40 {strides = array<i32>} : memref<8x128xf32, #tpu.memory_space<vmem>>, vector<8x128xf32>,
    } else {
    }
    %c0 = arith.constant 0 : index
    %c0_1 = arith.constant 0 : index
    %c0_2 = arith.constant 0 : index
    %3 = vector.load %arg5[%c0, %c0_1, %c0_2] : memref<1x8x128xf32, #tpu.memory_space<vmem>>, vector<1x8x128xf32>
    %c0_3 = arith.constant 0 : index
    %c0_4 = arith.constant 0 : index
    %4 = vector.load %arg8[%c0_3, %c0_4] : memref<8x128xf32, #tpu.memory_space<vmem>>, vector<8x128xf32>
    %5 = arith.mulf %3, %3 : vector<1x8x128xf32>
    %cst = arith.constant dense<0.000000e+00> : vector<8x128xf32>
    %6 = vector.multi_reduction <add>, %5, %cst [0] : vector<1x8x128xf32> to vector<8x128xf32>
    %7 = arith.addf %4, %6 : vector<8x128xf32>
    %c0_5 = arith.constant 0 : index
    %c0_6 = arith.constant 0 : index
    %8 = vector.load %arg8[%c0_5, %c0_6] : memref<8x128xf32, #tpu.memory_space<vmem>>, vector<8x128xf32>
    tpu.vector_store %arg8[%c0_5, %c0_6], %7 {strides = array<i32>} : memref<8x128xf32, #tpu.memory_space<vmem>>, vector<8x128xf32>,
    %c0_7 = arith.constant 0 : index
    %c0_8 = arith.constant 0 : index
    %9 = vector.load %arg9[%c0_7, %c0_8] : memref<8x128xf32, #tpu.memory_space<vmem>>, vector<8x128xf32>
    %cst_9 = arith.constant dense<0.000000e+00> : vector<8x128xf32>
    %10 = vector.multi_reduction <add>, %3, %cst_9 [0] : vector<1x8x128xf32> to vector<8x128xf32>
    %11 = arith.addf %9, %10 : vector<8x128xf32>
    %c0_10 = arith.constant 0 : index
    %c0_11 = arith.constant 0 : index
    %12 = vector.load %arg9[%c0_10, %c0_11] : memref<8x128xf32, #tpu.memory_space<vmem>>, vector<8x128xf32>
    tpu.vector_store %arg9[%c0_10, %c0_11], %11 {strides = array<i32>} : memref<8x128xf32, #tpu.memory_space<vmem>>, vector<8x128xf32>,
    %c2_i32 = arith.constant 2 : i32
    %13 = arith.cmpi eq, %arg0, %c2_i32 : i32
    %14 = arith.extui %13 : i1 to i32
    %c0_i32_12 = arith.constant 0 : i32
    %15 = arith.cmpi ne, %14, %c0_i32_12 : i32
    scf.if %15 {
      %c0_13 = arith.constant 0 : index
      %c0_14 = arith.constant 0 : index
      %16 = vector.load %arg7[%c0_13, %c0_14] : memref<1x128xf32, #tpu.memory_space<vmem>>, vector<1x128xf32>
      %c0_15 = arith.constant 0 : index
      %c0_16 = arith.constant 0 : index
      %17 = vector.load %arg8[%c0_15, %c0_16] : memref<8x128xf32, #tpu.memory_space<vmem>>, vector<8x128xf32>
      %18 = vector.shape_cast %17 : vector<8x128xf32> to vector<1x8x128xf32>
      %cst_17 = arith.constant dense<0.000000e+00> : vector<1xf32>
      %19 = vector.multi_reduction <add>, %18, %cst_17 [1, 2] : vector<1x8x128xf32> to vector<1xf32>
      %20 = vector.shape_cast %19 : vector<1xf32> to vector<1x1x1xf32>
      %21 = vector.extract %20[0, 0, 0] : f32 from vector<1x1x1xf32>
      %c0_18 = arith.constant 0 : index
      %c0_19 = arith.constant 0 : index
      %22 = vector.load %arg9[%c0_18, %c0_19] : memref<8x128xf32, #tpu.memory_space<vmem>>, vector<8x128xf32>
      %23 = vector.broadcast %16 : vector<1x128xf32> to vector<8x128xf32>
      %24 = arith.mulf %22, %23 : vector<8x128xf32>
      %25 = vector.shape_cast %24 : vector<8x128xf32> to vector<1x8x128xf32>
      %cst_20 = arith.constant dense<0.000000e+00> : vector<1xf32>
      %26 = vector.multi_reduction <add>, %25, %cst_20 [1, 2] : vector<1x8x128xf32> to vector<1xf32>
      %27 = vector.shape_cast %26 : vector<1xf32> to vector<1x1x1xf32>
      %28 = vector.extract %27[0, 0, 0] : f32 from vector<1x1x1xf32>
      %29 = arith.mulf %16, %16 : vector<1x128xf32>
      %30 = vector.shape_cast %29 : vector<1x128xf32> to vector<1x1x128xf32>
      %cst_21 = arith.constant dense<0.000000e+00> : vector<1xf32>
      %31 = vector.multi_reduction <add>, %30, %cst_21 [1, 2] : vector<1x1x128xf32> to vector<1xf32>
      %32 = vector.shape_cast %31 : vector<1xf32> to vector<1x1x1xf32>
      %33 = vector.extract %32[0, 0, 0] : f32 from vector<1x1x1xf32>
      %cst_22 = arith.constant 2.000000e+00 : f32
      %34 = arith.mulf %cst_22, %28 : f32
      %35 = arith.subf %21, %34 : f32
      %cst_23 = arith.constant 2.000000e+01 : f32
      %36 = arith.mulf %cst_23, %33 : f32
      %37 = arith.addf %35, %36 : f32
      %38 = arith.divf %37, %21 : f32
      %c0_24 = arith.constant 0 : index
      %c0_25 = arith.constant 0 : index
      %39 = memref.load %arg6[%c0_24, %c0_25] : memref<1x1xf32, #tpu.memory_space<smem>>
      memref.store %38, %arg6[%c0_24, %c0_25] : memref<1x1xf32, #tpu.memory_space<smem>>
    } else {
    }
    return
  }
  func.func @transform_0(%arg0: i32, %arg1: memref<1xi32, #tpu.memory_space<smem>>) -> i32 {
    %c0_i32 = arith.constant 0 : i32
    %c0_i32_0 = arith.constant 0 : i32
    return %c0_i32 : i32
  }
  func.func @transform_1(%arg0: i32, %arg1: memref<1xi32, #tpu.memory_space<smem>>) -> (i32, i32) {
    %c0_i32 = arith.constant 0 : i32
    %c0_i32_0 = arith.constant 0 : i32
    %c0_i32_1 = arith.constant 0 : i32
    return %c0_i32, %c0_i32_0 : i32, i32
  }
  func.func @transform_2(%arg0: i32, %arg1: memref<1xi32, #tpu.memory_space<smem>>) -> (i32, i32) {
    %c0_i32 = arith.constant 0 : i32
    %c0_i32_0 = arith.constant 0 : i32
    %c0_i32_1 = arith.constant 0 : i32
    return %c0_i32, %c0_i32_0 : i32, i32
  }
  func.func @transform_3(%arg0: i32, %arg1: memref<1xi32, #tpu.memory_space<smem>>) -> (i32, i32, i32) {
    %c0_i32 = arith.constant 0 : i32
    %c0_i32_0 = arith.constant 0 : i32
    %c0_i32_1 = arith.constant 0 : i32
    return %arg0, %c0_i32, %c0_i32_0 : i32, i32, i32
  }
  func.func @transform_4(%arg0: i32, %arg1: memref<1xi32, #tpu.memory_space<smem>>) -> (i32, i32) {
    %c0_i32 = arith.constant 0 : i32
    %c0_i32_0 = arith.constant 0 : i32
    %c0_i32_1 = arith.constant 0 : i32
    return %c0_i32, %c0_i32_0 : i32, i32
  }
}

</mosaic_0001>

<llo_original>
// kernel: tpu_custom_call.1
$region0: #{tpu_custom_call.1}
  #allocation0 [shape = 'u32[]', space=smem, size = 0x4, offset = 0x4, fixed_abs, tag = 'smem constant byte address 0x4 - core index']
  #allocation1 [shape = 'u32[144,128]{1,0:T(1,128)}', space=vmem, size = 0x12000, scoped, tag = 'internal scratch']
  #allocation2 [shape = 'f32[1,128]{1,0:T(1,128)}', space=vmem, size = 0x200, scoped, tag = 'scratch operand']
  #allocation3 [shape = 'f32[8,128]{1,0:T(8,128)}', space=vmem, size = 0x1000, scoped, tag = 'scratch operand']
  #allocation4 [shape = 'f32[8,128]{1,0:T(8,128)}', space=vmem, size = 0x1000, scoped, tag = 'scratch operand']
  #allocation5 [shape = 's32[1]{0}', space=sflag, size = 0x4, scoped, tag = 'scoped memory for tpu_custom_call.1']
  #allocation6 [shape = 's32[1]{0:T(128)S(6)}', space=smem, size = 0x200, scoped, tag = 'prefetched SMEM operand 0']
  %s0 = inlined_call_operand.<no memory space> [shape: s32[1], index: 0, kind: input, shape index: {}]
  %s1 = inlined_call_operand.vmem [shape: f32[4], index: 1, kind: input, shape index: {}]
  %s2 = inlined_call_operand.vmem [shape: f32[1,4], index: 2, kind: input, shape index: {}]
  %s3 = inlined_call_operand.vmem [shape: f32[4,128], index: 3, kind: input, shape index: {}]
  %s4 = inlined_call_operand.hbm [shape: f32[3,8,128], index: 4, kind: input, shape index: {}]
  %s5 = inlined_call_operand.hbm [shape: f32[1,1], index: 5, kind: output, shape index: {}]
  %s6 = sld [smem:[#allocation0]]
  $region65: #{tpu_custom_call.1} parent=0
    _
  %s8 = ssub.s32 1, %s6
  %s9 = scalar_select 0, %s8, %s6
  %10 = sst [smem:[#allocation6]] %s0
  $region1: #{tpu_custom_call.1} parent=0
    #allocation7 [shape = 'u8[512]{0}', space=smem, size = 0x200, scoped, tag = 'input window, operand 1, single buffered']
    #allocation8 [shape = 's32[2]{0}', space=sflag, size = 0x8, scoped, tag = 'scoped memory for tpu_custom_call.1']
    #allocation9 [shape = 's32[2]{0}', space=sflag, size = 0x8, scoped, tag = 'scoped memory for tpu_custom_call.1']
    #allocation10 [shape = 's32[2]{0}', space=sflag, size = 0x8, scoped, tag = 'scoped memory for tpu_custom_call.1']
    #allocation11 [shape = 'u8[8192]{0}', space=vmem, size = 0x2000, scoped, tag = 'input window, operand 4']
    #allocation12 [shape = 'u8[512]{0}', space=smem, size = 0x200, scoped, tag = 'output window, operand 0, single buffered']
    %11 = vsyncpa [#allocation10], 0
    %12 = vsyncpa [#allocation8], 0
    %s13 = scalar_lea.sflag [#allocation8], 1
    %14 = vsyncpa %s13, 0
    %15 = vsyncpa [#allocation9], 0
    loop: start=0, step=1, limit=5
    $region2: #{tpu_custom_call.1} parent=1 // loop_pre_header
      _
    $region3: #{tpu_custom_call.1} parent=1 // loop_header
      %s17 = sphi 0, %s21
      %p18 = scmp.ge.s32.totalorder %s17, 5
      %s25 = sphi 0, %s25
      %s27 = sphi 0, %s25
      %s28 = sphi 0, %s27
      %s42 = sphi 0, %s28
      %s46 = sphi 0, %s46
      %s48 = sphi 0, %s46
      %s49 = sphi 0, %s48
      %s63 = sphi 0, %s49
      %s67 = sphi 0, %s67
      %s69 = sphi 0, %s67
      %s70 = sphi 0, %s69
      %s84 = sphi 0, %s70
      %s90 = sphi 0, %s92
      %s93 = sphi 0, %s90
      %s94 = sphi 0, %s93
      %s110 = sphi 0, %s94
      %s114 = sphi 0, %s114
      %s116 = sphi 0, %s114
      %s117 = sphi 0, %s116
      %s131 = sphi 0, %s117
    $region4: #{tpu_custom_call.1} parent=1 // loop_header_branch
      %20 = sbr.rel (%p18) target = $region8
    $region5: #{tpu_custom_call.1} parent=1 // loop_body
      %s22 = ssub.s32 %s17, 1
      %s23 = ssub.s32 %s17, 2
      %s24 = sadd.s32 %s17, 1
      %s26 = sadd.s32 %s25, 1
      %p29 = scmp.eq.s32.totalorder %s17, 2
      %p30 = scmp.ne.s32.totalorder %s25, %s27
      %p31 = scmp.eq.s32.totalorder %s17, 0
      %p32 = por %p30, %p31
      %p33 = scmp.ne.s32.totalorder %s25, %s27
      %p34 = scmp.eq.s32.totalorder %s22, 2
      %p35 = por %p33, %p34
      %p36 = scmp.ne.s32.totalorder %s27, %s28
      %p37 = scmp.eq.s32.totalorder %s22, 0
      %p38 = por %p36, %p37
      %p39 = scmp.ne.s32.totalorder %s27, %s28
      %p40 = scmp.eq.s32.totalorder %s23, 2
      %p41 = por %p39, %p40
      %p43 = scmp.ne.s32.totalorder %s28, %s42
      %p44 = scmp.eq.s32.totalorder %s23, 0
      %p45 = por %p43, %p44
      %s47 = sadd.s32 %s46, 1
      %p50 = scmp.eq.s32.totalorder %s17, 2
      %p51 = scmp.ne.s32.totalorder %s46, %s48
      %p52 = scmp.eq.s32.totalorder %s17, 0
      %p53 = por %p51, %p52
      %p54 = scmp.ne.s32.totalorder %s46, %s48
      %p55 = scmp.eq.s32.totalorder %s22, 2
      %p56 = por %p54, %p55
      %p57 = scmp.ne.s32.totalorder %s48, %s49
      %p58 = scmp.eq.s32.totalorder %s22, 0
      %p59 = por %p57, %p58
      %p60 = scmp.ne.s32.totalorder %s48, %s49
      %p61 = scmp.eq.s32.totalorder %s23, 2
      %p62 = por %p60, %p61
      %p64 = scmp.ne.s32.totalorder %s49, %s63
      %p65 = scmp.eq.s32.totalorder %s23, 0
      %p66 = por %p64, %p65
      %s68 = sadd.s32 %s67, 1
      %p71 = scmp.eq.s32.totalorder %s17, 2
      %p72 = scmp.ne.s32.totalorder %s67, %s69
      %p73 = scmp.eq.s32.totalorder %s17, 0
      %p74 = por %p72, %p73
      %p75 = scmp.ne.s32.totalorder %s67, %s69
      %p76 = scmp.eq.s32.totalorder %s22, 2
      %p77 = por %p75, %p76
      %p78 = scmp.ne.s32.totalorder %s69, %s70
      %p79 = scmp.eq.s32.totalorder %s22, 0
      %p80 = por %p78, %p79
      %p81 = scmp.ne.s32.totalorder %s69, %s70
      %p82 = scmp.eq.s32.totalorder %s23, 2
      %p83 = por %p81, %p82
      %p85 = scmp.ne.s32.totalorder %s70, %s84
      %p86 = scmp.eq.s32.totalorder %s23, 0
      %p87 = por %p85, %p86
      %s88 = ssub.s32 %s17, %s24
      %p89 = scmp.eq.s32.totalorder %s88, 0
      %s91 = sadd.s32 %s90, 1
      %s92 = scalar_select %p89, %s90, %s91
      %p95 = pneg %p89
      %p96 = scmp.eq.s32.totalorder %s17, 2
      %p97 = por %p95, %p96
      %p98 = scmp.ne.s32.totalorder %s90, %s93
      %p99 = scmp.eq.s32.totalorder %s17, 0
      %p100 = por %p98, %p99
      %p101 = scmp.ne.s32.totalorder %s90, %s93
      %p102 = scmp.eq.s32.totalorder %s22, 2
      %p103 = por %p101, %p102
      %p104 = scmp.ne.s32.totalorder %s93, %s94
      %p105 = scmp.eq.s32.totalorder %s22, 0
      %p106 = por %p104, %p105
      %p107 = scmp.ne.s32.totalorder %s93, %s94
      %p108 = scmp.eq.s32.totalorder %s23, 2
      %p109 = por %p107, %p108
      %p111 = scmp.ne.s32.totalorder %s94, %s110
      %p112 = scmp.eq.s32.totalorder %s23, 0
      %p113 = por %p111, %p112
      %s115 = sadd.s32 %s114, 1
      %p118 = scmp.eq.s32.totalorder %s17, 2
      %p119 = scmp.ne.s32.totalorder %s114, %s116
      %p120 = scmp.eq.s32.totalorder %s17, 0
      %p121 = por %p119, %p120
      %p122 = scmp.ne.s32.totalorder %s114, %s116
      %p123 = scmp.eq.s32.totalorder %s22, 2
      %p124 = por %p122, %p123
      %p125 = scmp.ne.s32.totalorder %s116, %s117
      %p126 = scmp.eq.s32.totalorder %s22, 0
      %p127 = por %p125, %p126
      %p128 = scmp.ne.s32.totalorder %s116, %s117
      %p129 = scmp.eq.s32.totalorder %s23, 2
      %p130 = por %p128, %p129
      %p132 = scmp.ne.s32.totalorder %s117, %s131
      %p133 = scmp.eq.s32.totalorder %s23, 0
      %p134 = por %p132, %p133
      %p135 = scmp.le.s32.totalorder 1, %s17
      %p136 = scmp.lt.s32.totalorder %s17, 4
      %p137 = pnand %p135, %p136
      %p138 = pneg %p137
      // Predicated region
      $region9: #{tpu_custom_call.1} parent=5 // pred_check
        _
      $region10: #{tpu_custom_call.1} parent=5 // pred_check_branch
        %140 = sbr.rel (%p137) target = $region12
      $region11: #{tpu_custom_call.1} parent=5 // pred_region
        %s141 = ssub.s32 %s17, 1
        // Predicated region
        $region13: #{tpu_custom_call.1} parent=11 // pred_check
          %p142 = pneg %p38
        $region14: #{tpu_custom_call.1} parent=11 // pred_check_branch
          %144 = sbr.rel (%p142) target = $region16
        $region15: #{tpu_custom_call.1} parent=11 // pred_region
          %s146 = ssub.s32 16, 16
          %147 = vsyncadd [#allocation10], %s146
          %s149 = sshll.u32 %s1, 4
          %s150 = int_to_ptr.vmem [resolvable:$true] %s149
          %152 = dma.vmem_to_smem %s150, 16, [#allocation7], [#allocation10]
        $region16: #{tpu_custom_call.1} parent=11 // pred_fallthru
          _
        // Predicated region
        $region17: #{tpu_custom_call.1} parent=11 // pred_check
          %p153 = pneg %p59
        $region18: #{tpu_custom_call.1} parent=11 // pred_check_branch
          %155 = sbr.rel (%p153) target = $region20
        $region19: #{tpu_custom_call.1} parent=11 // pred_region
          _
        $region20: #{tpu_custom_call.1} parent=11 // pred_fallthru
          _
        // Predicated region
        $region21: #{tpu_custom_call.1} parent=11 // pred_check
          %p156 = pneg %p80
        $region22: #{tpu_custom_call.1} parent=11 // pred_check_branch
          %158 = sbr.rel (%p156) target = $region24
        $region23: #{tpu_custom_call.1} parent=11 // pred_region
          _
        $region24: #{tpu_custom_call.1} parent=11 // pred_fallthru
          _
      $region12: #{tpu_custom_call.1} parent=5 // pred_fallthru
        _
      %p159 = scmp.lt.s32.totalorder %s17, 3
      // Predicated region
      $region25: #{tpu_custom_call.1} parent=5 // pred_check
        %p160 = pneg %p159
      $region26: #{tpu_custom_call.1} parent=5 // pred_check_branch
        %162 = sbr.rel (%p160) target = $region28
      $region27: #{tpu_custom_call.1} parent=5 // pred_region
        // Predicated region
        $region29: #{tpu_custom_call.1} parent=27 // pred_check
          %p163 = pneg %p100
        $region30: #{tpu_custom_call.1} parent=27 // pred_check_branch
          %165 = sbr.rel (%p163) target = $region32
        $region31: #{tpu_custom_call.1} parent=27 // pred_region
          %s166 = sand.u32 %s90, 1
          %s167 = scalar_lea.sflag [#allocation8], %s166
          %s168 = sand.u32 %s90, 1
          %s169 = smul.addr %s168, 8
          %s170 = scalar_lea.vmem [#allocation11], %s169
          %s172 = ssub.s32 128, 128
          %173 = vsyncadd %s167, %s172
          %s174 = smul.addr %s17, 128
          %s175 = scalar_lea.hbm %s4, %s174
          %s177 = sshll.u32 %s170, 4
          %s178 = int_to_ptr.vmem [resolvable:$true] %s177
          %180 = dma.hbm_to_vmem [thread:$0]  %s175, 128, %s178, %s167
        $region32: #{tpu_custom_call.1} parent=27 // pred_fallthru
          _
      $region28: #{tpu_custom_call.1} parent=5 // pred_fallthru
        _
      %p181 = scmp.le.s32.totalorder 1, %s17
      %p182 = scmp.lt.s32.totalorder %s17, 4
      %p183 = pnand %p181, %p182
      %p184 = pneg %p183
      // Predicated region
      $region33: #{tpu_custom_call.1} parent=5 // pred_check
        _
      $region34: #{tpu_custom_call.1} parent=5 // pred_check_branch
        %186 = sbr.rel (%p183) target = $region36
      $region35: #{tpu_custom_call.1} parent=5 // pred_region
        %s187 = ssub.s32 %s17, 1
        // Predicated region
        $region37: #{tpu_custom_call.1} parent=35 // pred_check
          %p188 = pneg %p38
        $region38: #{tpu_custom_call.1} parent=35 // pred_check_branch
          %190 = sbr.rel (%p188) target = $region40
        $region39: #{tpu_custom_call.1} parent=35 // pred_region
          %191 = dma.done [#allocation10], 16
        $region40: #{tpu_custom_call.1} parent=35 // pred_fallthru
          _
        %s192 = sand.u32 %s93, 1
        %s193 = scalar_lea.sflag [#allocation8], %s192
        %s194 = sand.u32 %s93, 1
        %s195 = smul.addr %s194, 8
        %s196 = scalar_lea.vmem [#allocation11], %s195
        // Predicated region
        $region41: #{tpu_custom_call.1} parent=35 // pred_check
          %p197 = pneg %p106
        $region42: #{tpu_custom_call.1} parent=35 // pred_check_branch
          %199 = sbr.rel (%p197) target = $region44
        $region43: #{tpu_custom_call.1} parent=35 // pred_region
          %200 = dma.done %s193, 128
        $region44: #{tpu_custom_call.1} parent=35 // pred_fallthru
          _
        %201 = sfence
        %p202 = pneg %p38
        %p203 = pneg %p35
        %p204 = pneg %p59
        %p205 = pneg %p56
        %p206 = pneg %p80
        %p207 = pneg %p77
        %s208 = sand.u32 %s93, 1
        %s209 = scalar_lea.sflag [#allocation8], %s208
        %s210 = sand.u32 %s93, 1
        %s211 = smul.addr %s210, 8
        %s212 = scalar_lea.vmem [#allocation11], %s211
        %p213 = pneg %p106
        %p214 = pneg %p103
        %p215 = pneg %p127
        %p216 = pneg %p124
        %p217 = scmp.eq.s32.totalorder %s22, 0
        // Predicated region
        $region45: #{tpu_custom_call.1} parent=35 // pred_check
          %p218 = pneg %p217
        $region46: #{tpu_custom_call.1} parent=35 // pred_check_branch
          %220 = sbr.rel (%p218) target = $region48
        $region47: #{tpu_custom_call.1} parent=35 // pred_region
          %v221 = vld [vmem:[%s3] sm:$0x1]
          %s222 = sld [smem:[#allocation7]]
          %v223 = vstv %s222
          %v224 = vmul.f32 %v223, %v221
          %v225 = vadd.f32 %v224, 0.0
          %v226 = vld [vmem:[%s3 + $0x1] sm:$0x1]
          %s227 = sld [smem:[#allocation7 + $0x1]]
          %v228 = vstv %s227
          %v229 = vmul.f32 %v228, %v226
          %v230 = vadd.f32 %v225, %v229
          %v231 = vld [vmem:[%s3 + $0x2] sm:$0x1]
          %s232 = sld [smem:[#allocation7 + $0x2]]
          %v233 = vstv %s232
          %v234 = vmul.f32 %v233, %v231
          %v235 = vadd.f32 %v230, %v234
          %v236 = vld [vmem:[%s3 + $0x3] sm:$0x1]
          %s237 = sld [smem:[#allocation7 + $0x3]]
          %v238 = vstv %s237
          %v239 = vmul.f32 %v238, %v236
          %v240 = vadd.f32 %v235, %v239
          %241 = vst [vmem:[#allocation2] sm:$0x1] %v240
          %242 = vst [vmem:[#allocation3] sm:$0xff] 0.0
          %243 = vst [vmem:[#allocation4] sm:$0xff] 0.0
        $region48: #{tpu_custom_call.1} parent=35 // pred_fallthru
          _
        %v244 = vld [vmem:[%s196] sm:$0xff]
        %v245 = vld [vmem:[#allocation3] sm:$0xff]
        %v246 = vmul.f32 %v244, %v244
        %v247 = vadd.f32 %v246, 0.0
        %v248 = vadd.f32 %v245, %v247
        %249 = vst [vmem:[#allocation3] sm:$0xff] %v248
        %v250 = vld [vmem:[#allocation4] sm:$0xff]
        %v251 = vadd.f32 %v244, 0.0
        %v252 = vadd.f32 %v250, %v251
        %253 = vst [vmem:[#allocation4] sm:$0xff] %v252
        %p254 = scmp.eq.s32.totalorder %s22, 2
        // Predicated region
        $region49: #{tpu_custom_call.1} parent=35 // pred_check
          %p255 = pneg %p254
        $region50: #{tpu_custom_call.1} parent=35 // pred_check_branch
          %257 = sbr.rel (%p255) target = $region52
        $region51: #{tpu_custom_call.1} parent=35 // pred_region
          %v258 = vld [vmem:[#allocation2] sm:$0x1]
          %v259 = vld [vmem:[#allocation3] sm:$0xff]
          %260 = vadd.xlane.f32.xlu0 %v259
          %v261 = vpop.xlane.xlu0 %260
          %v262 = vrot.slane %v261, 4
          %v263 = vadd.f32 %v261, %v262
          %v264 = vrot.slane %v263, 2
          %v265 = vadd.f32 %v263, %v264
          %v266 = vrot.slane %v265, 1
          %v267 = vadd.f32 %v265, %v266
          %s268 = vtos %v267
          %v269 = vld [vmem:[#allocation4] sm:$0xff]
          %v271 = vlaneseq
          %v272 = vshrl.u32 %v271, 7
          %v273 = vsub.s32 0, %v272
          %v274 = vrot.slane %v258, %v273
          %v276 = vmul.f32 %v269, %v274
          %277 = vadd.xlane.f32.xlu0 %v276
          %v278 = vpop.xlane.xlu0 %277
          %v279 = vrot.slane %v278, 4
          %v280 = vadd.f32 %v278, %v279
          %v281 = vrot.slane %v280, 2
          %v282 = vadd.f32 %v280, %v281
          %v283 = vrot.slane %v282, 1
          %v284 = vadd.f32 %v282, %v283
          %s285 = vtos %v284
          %v286 = vmul.f32 %v258, %v258
          %vm287 = vcmask 1040384
          %v288 = vsel %vm287, %v286, 0.0
          %289 = vadd.xlane.f32.xlu0 %v288
          %v290 = vpop.xlane.xlu0 %289
          %v291 = vrot.slane %v290, 4
          %v292 = vadd.f32 %v290, %v291
          %v293 = vrot.slane %v292, 2
          %v294 = vadd.f32 %v292, %v293
          %v295 = vrot.slane %v294, 1
          %v296 = vadd.f32 %v294, %v295
          %s297 = vtos %v296
          %s298 = smul.f32 %s285, 2.0
          %s299 = ssub.f32 %s268, %s298
          %s300 = smul.f32 %s297, 20.0
          %s301 = sadd.f32 %s299, %s300
          %v302 = vstv %s268
          %v303 = vrcp.pop %v302
          %s304 = vtos %v303
          %s305 = smul.f32 %s301, %s304
          %s306 = scalar_lea.smem [#allocation12], 0
          %307 = sst [smem:[%s306]] %s305
        $region52: #{tpu_custom_call.1} parent=35 // pred_fallthru
          _
        // Predicated region
        $region53: #{tpu_custom_call.1} parent=35 // pred_check
          %p308 = pneg %p124
        $region54: #{tpu_custom_call.1} parent=35 // pred_check_branch
          %310 = sbr.rel (%p308) target = $region56
        $region55: #{tpu_custom_call.1} parent=35 // pred_region
          %s312 = ssub.s32 16, 16
          %313 = vsyncadd [#allocation9], %s312
          %316 = dma.smem_to_hbm [#allocation12], 16, %s5, [#allocation9]
        $region56: #{tpu_custom_call.1} parent=35 // pred_fallthru
          _
        // Predicated region
        $region57: #{tpu_custom_call.1} parent=35 // pred_check
          %p317 = pneg %p124
        $region58: #{tpu_custom_call.1} parent=35 // pred_check_branch
          %319 = sbr.rel (%p317) target = $region60
        $region59: #{tpu_custom_call.1} parent=35 // pred_region
          %320 = dma.done [#allocation9], 16
        $region60: #{tpu_custom_call.1} parent=35 // pred_fallthru
          _
        %321 = sfence
      $region36: #{tpu_custom_call.1} parent=5 // pred_fallthru
        _
      %p322 = scmp.le.s32.totalorder 2, %s17
      // Predicated region
      $region61: #{tpu_custom_call.1} parent=5 // pred_check
        %p323 = pneg %p322
      $region62: #{tpu_custom_call.1} parent=5 // pred_check_branch
        %325 = sbr.rel (%p323) target = $region64
      $region63: #{tpu_custom_call.1} parent=5 // pred_region
        %s326 = ssub.s32 %s17, 2
      $region64: #{tpu_custom_call.1} parent=5 // pred_fallthru
        _
    $region6: #{tpu_custom_call.1} parent=1 // loop_footer
      %s21 = sadd.s32 1, %s17
    $region7: #{tpu_custom_call.1} parent=1 // loop_footer_branch
      %16 = sbr.rel target = $region3
    $region8: #{tpu_custom_call.1} parent=1 // loop_exit
      _
    %327 = vsyncpa [#allocation8], 1
    %s328 = scalar_lea.sflag [#allocation8], 1
    %329 = vsyncpa %s328, 1
    %330 = vsyncpa [#allocation9], 1
    %s331 = scalar_lea.sflag [#allocation9], 1
    %332 = vsyncpa %s331, 1
    %333 = vsyncpa [#allocation10], 1
    %s334 = scalar_lea.sflag [#allocation10], 1
    %335 = vsyncpa %s334, 1

</llo_original>
